<compile_context>
chip_gen: v7x
topology: tpu7x:2x2x1
jax: 0.10.0
libtpu: 0.0.40
codegen_flags: <defaults>
</compile_context>

<pallas_src>
import jax
import jax.numpy as jnp
import numpy as np
from jax import lax
from jax.experimental import pallas as pl
from jax.experimental.pallas import tpu as pltpu


def _round_up(n, m):
    return ((n + m - 1) // m) * m


# Conservative resident-weight budget (v7x has only 64 MiB physical VMEM per TensorCore).
_RESIDENT_VMEM_BUDGET = 32 * 1024 * 1024


# -----------------------------------------------------------------------------
# Fast path: single invocation (no grid), all weights resident in VMEM, layer
# loop statically unrolled with static indices.
# -----------------------------------------------------------------------------
def _make_resident_kernel(num_layers, num_real_rows, real_dim, threshold):
    thr = float(threshold)                       # Python scalar -> inlined literal
    inv_count = 1.0 / float(num_real_rows * real_dim)
    inv_layers = 1.0 / float(max(num_layers, 1))

    def kernel(x_ref, w_ref, b_ref, wc_ref, bc_ref, logits_ref, skip_ref):
        b_pad, d_pad = x_ref.shape
        # Row mask keeps padded batch rows exactly zero so full-tile reductions equal
        # reductions over the real rows (no sub-sublane masked slices).
        row_ids = lax.broadcasted_iota(jnp.int32, (b_pad, d_pad), 0)
        row_mask = (row_ids < num_real_rows).astype(jnp.float32)

        x = x_ref[...]                                   # (B_pad, D_pad) f32, padded rows zero
        act = jnp.sum(jnp.abs(x)) * inv_count            # whole-batch mean(|x|)
        skip = jnp.float32(0.0)

        for l in range(num_layers):                      # static unroll, weights already in VMEM
            skipped = act > thr
            w = w_ref[l]                                  # (D_pad, D_pad) bf16, static index
            y = jnp.dot(x.astype(w.dtype), w, preferred_element_type=jnp.float32)
            y = jnp.maximum(y + b_ref[l], 0.0) * row_mask  # f32 bias + relu; padded rows -> 0
            act_y = jnp.sum(jnp.abs(y)) * inv_count
            x = jnp.where(skipped, x, y)
            act = jnp.where(skipped, act, act_y)
            skip = skip + jnp.where(skipped, 1.0, 0.0)

        logits = jnp.dot(x.astype(wc_ref.dtype), wc_ref[...],
                         preferred_element_type=jnp.float32) + bc_ref[...]
        logits_ref[...] = logits.astype(logits_ref.dtype)
        skip_ref[...] = jnp.broadcast_to((skip * inv_layers).astype(jnp.float32),
                                         skip_ref.shape)

    return kernel


# -----------------------------------------------------------------------------
# Fallback path for large L*D^2: grid=(L,), one layer weight streamed per step
# (double-buffered by the BlockSpec pipeline).  Biases stay resident, the
# activity scalar is cached in SMEM, x is carried in a VMEM scratch.
# -----------------------------------------------------------------------------
def _make_streamed_kernel(num_layers, num_real_rows, real_dim, threshold):
    thr = float(threshold)
    inv_count = 1.0 / float(num_real_rows * real_dim)
    inv_layers = 1.0 / float(max(num_layers, 1))

    def kernel(x_ref, w_ref, b_ref, wc_ref, bc_ref,       # inputs
               logits_ref, skip_ref,                       # outputs
               x_scr, act_scr, skip_scr):                  # scratch
        l = pl.program_id(0)
        last = pl.num_programs(0) - 1
        b_pad, d_pad = x_scr.shape
        row_ids = lax.broadcasted_iota(jnp.int32, (b_pad, d_pad), 0)
        row_mask = (row_ids < num_real_rows).astype(jnp.float32)

        @pl.when(l == 0)
        def _init():
            x0 = x_ref[...]
            x_scr[...] = x0
            act_scr[0] = jnp.sum(jnp.abs(x0)) * inv_count
            skip_scr[0] = jnp.int32(0)

        # Routing decision from a precomputed SMEM scalar: available immediately at step
        # start, no per-step reload of the (B, D) tile.
        skipped = act_scr[0] > thr

        # TODO(synk): in skip-heavy regimes the weight DMA itself could be gated via a
        # manual double buffer (once skipped -> always skipped), but at streamed sizes the
        # BlockSpec pipeline keeps it off the critical path.
        @pl.when(jnp.logical_not(skipped))
        def _apply_block():
            x = x_scr[...]
            w = w_ref[0]                                   # (D_pad, D_pad) bf16, this step's layer
            y = jnp.dot(x.astype(w.dtype), w, preferred_element_type=jnp.float32)
            y = jnp.maximum(y + b_ref[l], 0.0) * row_mask  # f32 epilogue; padded rows -> 0
            x_scr[...] = y
            act_scr[0] = jnp.sum(jnp.abs(y)) * inv_count   # cache next step's routing scalar

        @pl.when(skipped)
        def _count_skip():
            skip_scr[0] = skip_scr[0] + 1

        @pl.when(l == last)
        def _classify():
            x = x_scr[...]
            logits = jnp.dot(x.astype(wc_ref.dtype), wc_ref[...],
                             preferred_element_type=jnp.float32) + bc_ref[...]
            logits_ref[...] = logits.astype(logits_ref.dtype)
            skip_ref[...] = jnp.broadcast_to(
                skip_scr[0].astype(jnp.float32) * inv_layers, skip_ref.shape)

    return kernel


def routing_classifier_forward(x, block_w, block_b, clf_w, clf_b, threshold,
                               force_streamed=False):
    """Forward pass of RoutingClassifier.

    x:        (B, *spatial)           flattened to (B, D)
    block_w:  (L, D, D)   nn.Linear layout (out, in)
    block_b:  (L, D)
    clf_w:    (C, D)      nn.Linear layout (out, in)
    clf_b:    (C,)
    Returns (logits (B, C) f32, skip_ratio scalar f32).
    """
    B = x.shape[0]
    x2 = x.reshape(B, -1).astype(jnp.float32)
    L, d_out, d_in = block_w.shape
    assert d_out == d_in == x2.shape[1]
    D = d_in
    C = clf_w.shape[0]

    # Pad batch to 8 sublanes, features / classes to 128 lanes (lane-dense stores).
    B_pad = max(8, _round_up(B, 8))
    D_pad = max(128, _round_up(D, 128))
    C_pad = max(128, _round_up(C, 128))

    # Pre-transpose to (in, out); bf16 weights (half the HBM traffic, MXU-native),
    # f32 everything else.  Zero padding keeps the math exact.
    x_p = jnp.zeros((B_pad, D_pad), jnp.float32).at[:B, :D].set(x2)
    w_t = jnp.zeros((L, D_pad, D_pad), jnp.bfloat16).at[:, :D, :D].set(
        jnp.swapaxes(block_w, 1, 2).astype(jnp.bfloat16))
    b_p = jnp.zeros((L, 1, D_pad), jnp.float32).at[:, 0, :D].set(
        block_b.astype(jnp.float32))
    wc_t = jnp.zeros((D_pad, C_pad), jnp.bfloat16).at[:D, :C].set(
        clf_w.T.astype(jnp.bfloat16))
    bc_p = jnp.zeros((1, C_pad), jnp.float32).at[0, :C].set(clf_b.astype(jnp.float32))

    out_shape = (jax.ShapeDtypeStruct((B_pad, C_pad), jnp.float32),
                 jax.ShapeDtypeStruct((1, 128), jnp.float32))

    # VMEM bytes if everything is resident (biases sublane-pad 1 -> 8).
    resident_bytes = (L * D_pad * D_pad * 2 + L * 8 * D_pad * 4 + B_pad * D_pad * 4
                      + D_pad * C_pad * 2 + 8 * C_pad * 4 + B_pad * C_pad * 4
                      + 8 * 128 * 4)
    use_resident = (not force_streamed) and resident_bytes <= _RESIDENT_VMEM_BUDGET

    if use_resident:
        kernel = _make_resident_kernel(L, B, D, threshold)
        vmem_limit = int(min(max(int(1.5 * resident_bytes) + (2 << 20), 8 << 20), 60 << 20))
        logits_p, skip_p = pl.pallas_call(
            kernel,
            out_shape=out_shape,
            in_specs=[pl.BlockSpec(memory_space=pltpu.MemorySpace.VMEM)] * 5,
            out_specs=(pl.BlockSpec(memory_space=pltpu.MemorySpace.VMEM),
                       pl.BlockSpec(memory_space=pltpu.MemorySpace.VMEM)),
            compiler_params=pltpu.CompilerParams(vmem_limit_bytes=vmem_limit),
        )(x_p, w_t, b_p, wc_t, bc_p)
    else:
        # TODO(synk): K-tile the (D, D) layer weight (extra reduction grid axis) when even a
        # single double-buffered layer (4*D_pad^2 bytes) no longer fits v7x's 64 MiB VMEM, and
        # late-prefetch the classifier weight instead of keeping it resident for all L steps.
        kernel = _make_streamed_kernel(L, B, D, threshold)
        streamed_bytes = (4 * D_pad * D_pad                 # double-buffered bf16 layer weight
                          + L * 8 * D_pad * 4 + 2 * B_pad * D_pad * 4
                          + D_pad * C_pad * 2 + 8 * C_pad * 4 + B_pad * C_pad * 4
                          + 8 * 128 * 4)
        vmem_limit = int(min(max(2 * streamed_bytes + (2 << 20), 8 << 20), 60 << 20))
        logits_p, skip_p = pl.pallas_call(
            kernel,
            out_shape=out_shape,
            grid=(L,),
            in_specs=[
                pl.BlockSpec((B_pad, D_pad), lambda l: (0, 0)),        # x: read on step 0
                pl.BlockSpec((1, D_pad, D_pad), lambda l: (l, 0, 0)),  # layer weight: streamed
                pl.BlockSpec((L, 1, D_pad), lambda l: (0, 0, 0)),      # biases: resident
                pl.BlockSpec((D_pad, C_pad), lambda l: (0, 0)),        # classifier weight
                pl.BlockSpec((1, C_pad), lambda l: (0, 0)),            # classifier bias
            ],
            out_specs=(
                pl.BlockSpec((B_pad, C_pad), lambda l: (0, 0)),        # logits (last step)
                pl.BlockSpec((1, 128), lambda l: (0, 0)),              # skip ratio (broadcast)
            ),
            scratch_shapes=[
                pltpu.VMEM((B_pad, D_pad), jnp.float32),               # x carry
                pltpu.SMEM((1,), jnp.float32),                         # cached activity scalar
                pltpu.SMEM((1,), jnp.int32),                           # skip counter
            ],
            compiler_params=pltpu.CompilerParams(
                dimension_semantics=("arbitrary",),                    # layer axis is sequential
                vmem_limit_bytes=vmem_limit,
            ),
        )(x_p, w_t, b_p, wc_t, bc_p)

    return logits_p[:B, :C], skip_p[0, 0]


def reference_forward(x, block_w, block_b, clf_w, clf_b, threshold):
    """Pure-JAX reference with identical routing semantics and dtype handling."""
    B = x.shape[0]
    xf = x.reshape(B, -1).astype(jnp.float32)
    L = block_w.shape[0]
    w_t = jnp.swapaxes(block_w, 1, 2).astype(jnp.bfloat16)
    wc_t = clf_w.T.astype(jnp.bfloat16)
    skip = jnp.float32(0.0)
    for l in range(L):
        act = jnp.mean(jnp.abs(xf))
        skipped = act > threshold
        y = jnp.dot(xf.astype(jnp.bfloat16), w_t[l], preferred_element_type=jnp.float32)
        y = jnp.maximum(y + block_b[l][None, :].astype(jnp.float32), 0.0)
        xf = jnp.where(skipped, xf, y)
        skip = skip + jnp.where(skipped, 1.0, 0.0)
    logits = jnp.dot(xf.astype(jnp.bfloat16), wc_t,
                     preferred_element_type=jnp.float32) + clf_b[None, :].astype(jnp.float32)
    return logits, skip / max(L, 1)


if __name__ == "__main__":
    # Small shapes consistent with the module: x (2, 4, 8, 8) -> input_dim = 256.
    B, Cin, H, W = 2, 4, 8, 8
    input_dim = Cin * H * W          # 256 (lane-aligned)
    num_classes = 16
    layers = 3

    key = jax.random.PRNGKey(0)
    kx, kw, kb, kwc, kbc = jax.random.split(key, 5)

    x = jax.random.normal(kx, (B, Cin, H, W), dtype=jnp.float32)

    # nn.Linear layout: weight (out, in), bias (out,).
    block_w = 0.2 * jax.random.normal(kw, (layers, input_dim, input_dim), dtype=jnp.float32)
    block_b = 0.05 * jax.random.normal(kb, (layers, input_dim), dtype=jnp.float32)
    clf_w = 0.05 * jax.random.normal(kwc, (num_classes, input_dim), dtype=jnp.float32)
    clf_b = 0.05 * jax.random.normal(kbc, (num_classes,), dtype=jnp.float32)

    # Exercise all-skip / mixed / all-apply routing, on both the resident fast path and the
    # streamed-grid fallback.
    for threshold in (0.1, 2.0, 100.0):
        ref_logits, ref_skip = reference_forward(x, block_w, block_b, clf_w, clf_b, threshold)
        ref_logits = jax.block_until_ready(ref_logits)
        for force_streamed in (False, True):
            logits, skip_ratio = routing_classifier_forward(
                x, block_w, block_b, clf_w, clf_b, threshold,
                force_streamed=force_streamed)
            logits = jax.block_until_ready(logits)
            skip_ratio = jax.block_until_ready(skip_ratio)

            np.testing.assert_allclose(np.asarray(logits), np.asarray(ref_logits),
                                       rtol=2e-2, atol=2e-2)
            np.testing.assert_allclose(float(skip_ratio), float(ref_skip), atol=1e-6)

    print("KERNEL_OK")
</pallas_src>

<mosaic_0001>
module attributes {stable_mosaic.version = 11 : i64} {
  func.func @kernel(%arg0: memref<8x256xf32, #tpu.memory_space<vmem>>, %arg1: memref<3x256x256xbf16, #tpu.memory_space<vmem>>, %arg2: memref<3x1x256xf32, #tpu.memory_space<vmem>>, %arg3: memref<256x128xbf16, #tpu.memory_space<vmem>>, %arg4: memref<1x128xf32, #tpu.memory_space<vmem>>, %arg5: memref<8x128xf32, #tpu.memory_space<vmem>>, %arg6: memref<1x128xf32, #tpu.memory_space<vmem>>) attributes {dimension_semantics = [], scalar_prefetch = 0 : i64, scratch_operands = 0 : i64, tpu.core_type = #tpu.core_type<tc>} {
    %0 = tpu.iota {dimensions = array<i32: 0>} : vector<8x256xi32>
    %c2_i32 = arith.constant 2 : i32
    %1 = vector.broadcast %c2_i32 : i32 to vector<8x256xi32>
    %2 = arith.cmpi slt, %0, %1 : vector<8x256xi32>
    %3 = arith.extui %2 : vector<8x256xi1> to vector<8x256xi32>
    %4 = arith.sitofp %3 : vector<8x256xi32> to vector<8x256xf32>
    %c0 = arith.constant 0 : index
    %c0_0 = arith.constant 0 : index
    %5 = vector.load %arg0[%c0, %c0_0] : memref<8x256xf32, #tpu.memory_space<vmem>>, vector<8x256xf32>
    %6 = math.absf %5 : vector<8x256xf32>
    %7 = vector.shape_cast %6 : vector<8x256xf32> to vector<1x8x256xf32>
    %cst = arith.constant dense<0.000000e+00> : vector<1xf32>
    %8 = vector.multi_reduction <add>, %7, %cst [1, 2] : vector<1x8x256xf32> to vector<1xf32>
    %9 = vector.shape_cast %8 : vector<1xf32> to vector<1x1x1xf32>
    %10 = vector.extract %9[0, 0, 0] : f32 from vector<1x1x1xf32>
    %cst_1 = arith.constant 0.001953125 : f32
    %11 = arith.mulf %10, %cst_1 : f32
    %cst_2 = arith.constant 1.000000e-01 : f32
    %12 = arith.cmpf ogt, %11, %cst_2 : f32
    %c0_3 = arith.constant 0 : index
    %c0_4 = arith.constant 0 : index
    %c0_5 = arith.constant 0 : index
    %13 = vector.load %arg1[%c0_3, %c0_4, %c0_5] : memref<3x256x256xbf16, #tpu.memory_space<vmem>>, vector<1x256x256xbf16>
    %14 = vector.shape_cast %13 : vector<1x256x256xbf16> to vector<256x256xbf16>
    %15 = arith.truncf %5 : vector<8x256xf32> to vector<8x256xbf16>
    %cst_6 = arith.constant dense<0.000000e+00> : vector<8x256xf32>
    %16 = tpu.matmul %15, %14, %cst_6 {dimension_numbers = #tpu.dot_dimension_numbers<[1], [0], [0], [1], [0, 0, 1, 1], [], []>} : vector<8x256xbf16>, vector<256x256xbf16>, vector<8x256xf32> -> vector<8x256xf32>
    %c0_7 = arith.constant 0 : index
    %c0_8 = arith.constant 0 : index
    %c0_9 = arith.constant 0 : index
    %17 = vector.load %arg2[%c0_7, %c0_8, %c0_9] : memref<3x1x256xf32, #tpu.memory_space<vmem>>, vector<1x1x256xf32>
    %18 = vector.shape_cast %17 : vector<1x1x256xf32> to vector<1x256xf32>
    %19 = vector.broadcast %18 : vector<1x256xf32> to vector<8x256xf32>
    %20 = arith.addf %16, %19 : vector<8x256xf32>
    %cst_10 = arith.constant 0.000000e+00 : f32
    %21 = vector.broadcast %cst_10 : f32 to vector<8x256xf32>
    %22 = arith.maximumf %20, %21 : vector<8x256xf32>
    %23 = arith.mulf %22, %4 : vector<8x256xf32>
    %24 = math.absf %23 : vector<8x256xf32>
    %25 = vector.shape_cast %24 : vector<8x256xf32> to vector<1x8x256xf32>
    %cst_11 = arith.constant dense<0.000000e+00> : vector<1xf32>
    %26 = vector.multi_reduction <add>, %25, %cst_11 [1, 2] : vector<1x8x256xf32> to vector<1xf32>
    %27 = vector.shape_cast %26 : vector<1xf32> to vector<1x1x1xf32>
    %28 = vector.extract %27[0, 0, 0] : f32 from vector<1x1x1xf32>
    %cst_12 = arith.constant 0.001953125 : f32
    %29 = arith.mulf %28, %cst_12 : f32
    %30 = arith.select %12, %5, %23 : vector<8x256xf32>
    %31 = arith.select %12, %11, %29 : f32
    %cst_13 = arith.constant 1.000000e+00 : f32
    %cst_14 = arith.constant 0.000000e+00 : f32
    %32 = arith.select %12, %cst_13, %cst_14 : f32
    %cst_15 = arith.constant 0.000000e+00 : f32
    %33 = arith.addf %cst_15, %32 : f32
    %cst_16 = arith.constant 1.000000e-01 : f32
    %34 = arith.cmpf ogt, %31, %cst_16 : f32
    %c1 = arith.constant 1 : index
    %c0_17 = arith.constant 0 : index
    %c0_18 = arith.constant 0 : index
    %35 = vector.load %arg1[%c1, %c0_17, %c0_18] : memref<3x256x256xbf16, #tpu.memory_space<vmem>>, vector<1x256x256xbf16>
    %36 = vector.shape_cast %35 : vector<1x256x256xbf16> to vector<256x256xbf16>
    %37 = arith.truncf %30 : vector<8x256xf32> to vector<8x256xbf16>
    %cst_19 = arith.constant dense<0.000000e+00> : vector<8x256xf32>
    %38 = tpu.matmul %37, %36, %cst_19 {dimension_numbers = #tpu.dot_dimension_numbers<[1], [0], [0], [1], [0, 0, 1, 1], [], []>} : vector<8x256xbf16>, vector<256x256xbf16>, vector<8x256xf32> -> vector<8x256xf32>
    %c1_20 = arith.constant 1 : index
    %c0_21 = arith.constant 0 : index
    %c0_22 = arith.constant 0 : index
    %39 = vector.load %arg2[%c1_20, %c0_21, %c0_22] : memref<3x1x256xf32, #tpu.memory_space<vmem>>, vector<1x1x256xf32>
    %40 = vector.shape_cast %39 : vector<1x1x256xf32> to vector<1x256xf32>
    %41 = vector.broadcast %40 : vector<1x256xf32> to vector<8x256xf32>
    %42 = arith.addf %38, %41 : vector<8x256xf32>
    %cst_23 = arith.constant 0.000000e+00 : f32
    %43 = vector.broadcast %cst_23 : f32 to vector<8x256xf32>
    %44 = arith.maximumf %42, %43 : vector<8x256xf32>
    %45 = arith.mulf %44, %4 : vector<8x256xf32>
    %46 = math.absf %45 : vector<8x256xf32>
    %47 = vector.shape_cast %46 : vector<8x256xf32> to vector<1x8x256xf32>
    %cst_24 = arith.constant dense<0.000000e+00> : vector<1xf32>
    %48 = vector.multi_reduction <add>, %47, %cst_24 [1, 2] : vector<1x8x256xf32> to vector<1xf32>
    %49 = vector.shape_cast %48 : vector<1xf32> to vector<1x1x1xf32>
    %50 = vector.extract %49[0, 0, 0] : f32 from vector<1x1x1xf32>
    %cst_25 = arith.constant 0.001953125 : f32
    %51 = arith.mulf %50, %cst_25 : f32
    %52 = arith.select %34, %30, %45 : vector<8x256xf32>
    %53 = arith.select %34, %31, %51 : f32
    %cst_26 = arith.constant 1.000000e+00 : f32
    %cst_27 = arith.constant 0.000000e+00 : f32
    %54 = arith.select %34, %cst_26, %cst_27 : f32
    %55 = arith.addf %33, %54 : f32
    %cst_28 = arith.constant 1.000000e-01 : f32
    %56 = arith.cmpf ogt, %53, %cst_28 : f32
    %c2 = arith.constant 2 : index
    %c0_29 = arith.constant 0 : index
    %c0_30 = arith.constant 0 : index
    %57 = vector.load %arg1[%c2, %c0_29, %c0_30] : memref<3x256x256xbf16, #tpu.memory_space<vmem>>, vector<1x256x256xbf16>
    %58 = vector.shape_cast %57 : vector<1x256x256xbf16> to vector<256x256xbf16>
    %59 = arith.truncf %52 : vector<8x256xf32> to vector<8x256xbf16>
    %cst_31 = arith.constant dense<0.000000e+00> : vector<8x256xf32>
    %60 = tpu.matmul %59, %58, %cst_31 {dimension_numbers = #tpu.dot_dimension_numbers<[1], [0], [0], [1], [0, 0, 1, 1], [], []>} : vector<8x256xbf16>, vector<256x256xbf16>, vector<8x256xf32> -> vector<8x256xf32>
    %c2_32 = arith.constant 2 : index
    %c0_33 = arith.constant 0 : index
    %c0_34 = arith.constant 0 : index
    %61 = vector.load %arg2[%c2_32, %c0_33, %c0_34] : memref<3x1x256xf32, #tpu.memory_space<vmem>>, vector<1x1x256xf32>
    %62 = vector.shape_cast %61 : vector<1x1x256xf32> to vector<1x256xf32>
    %63 = vector.broadcast %62 : vector<1x256xf32> to vector<8x256xf32>
    %64 = arith.addf %60, %63 : vector<8x256xf32>
    %cst_35 = arith.constant 0.000000e+00 : f32
    %65 = vector.broadcast %cst_35 : f32 to vector<8x256xf32>
    %66 = arith.maximumf %64, %65 : vector<8x256xf32>
    %67 = arith.mulf %66, %4 : vector<8x256xf32>
    %68 = arith.select %56, %52, %67 : vector<8x256xf32>
    %cst_36 = arith.constant 1.000000e+00 : f32
    %cst_37 = arith.constant 0.000000e+00 : f32
    %69 = arith.select %56, %cst_36, %cst_37 : f32
    %70 = arith.addf %55, %69 : f32
    %71 = arith.truncf %68 : vector<8x256xf32> to vector<8x256xbf16>
    %c0_38 = arith.constant 0 : index
    %c0_39 = arith.constant 0 : index
    %72 = vector.load %arg3[%c0_38, %c0_39] : memref<256x128xbf16, #tpu.memory_space<vmem>>, vector<256x128xbf16>
    %cst_40 = arith.constant dense<0.000000e+00> : vector<8x128xf32>
    %73 = tpu.matmul %71, %72, %cst_40 {dimension_numbers = #tpu.dot_dimension_numbers<[1], [0], [0], [1], [0, 0, 1, 1], [], []>} : vector<8x256xbf16>, vector<256x128xbf16>, vector<8x128xf32> -> vector<8x128xf32>
    %c0_41 = arith.constant 0 : index
    %c0_42 = arith.constant 0 : index
    %74 = vector.load %arg4[%c0_41, %c0_42] : memref<1x128xf32, #tpu.memory_space<vmem>>, vector<1x128xf32>
    %75 = vector.broadcast %74 : vector<1x128xf32> to vector<8x128xf32>
    %76 = arith.addf %73, %75 : vector<8x128xf32>
    %c0_43 = arith.constant 0 : index
    %c0_44 = arith.constant 0 : index
    %77 = vector.load %arg5[%c0_43, %c0_44] : memref<8x128xf32, #tpu.memory_space<vmem>>, vector<8x128xf32>
    tpu.vector_store %arg5[%c0_43, %c0_44], %76 {strides = array<i32>} : memref<8x128xf32, #tpu.memory_space<vmem>>, vector<8x128xf32>,
    %cst_45 = arith.constant 0.333333343 : f32
    %78 = arith.mulf %70, %cst_45 : f32
    %79 = vector.broadcast %78 : f32 to vector<1x128xf32>
    %c0_46 = arith.constant 0 : index
    %c0_47 = arith.constant 0 : index
    %80 = vector.load %arg6[%c0_46, %c0_47] : memref<1x128xf32, #tpu.memory_space<vmem>>, vector<1x128xf32>
    tpu.vector_store %arg6[%c0_46, %c0_47], %79 {strides = array<i32>} : memref<1x128xf32, #tpu.memory_space<vmem>>, vector<1x128xf32>,
    return
  }
}

</mosaic_0001>

<llo_original>
// kernel: tpu_custom_call.1
$region0: #{tpu_custom_call.1}
  #allocation0 [shape = 'u32[]', space=smem, size = 0x4, offset = 0x4, fixed_abs, tag = 'smem constant byte address 0x4 - core index']
  #allocation1 [shape = 'u32[144,128]{1,0:T(1,128)}', space=vmem, size = 0x12000, scoped, tag = 'internal scratch']
  %s0 = inlined_call_operand.hbm [shape: f32[8,256], index: 0, kind: input, shape index: {}]
  %s1 = inlined_call_operand.hbm [shape: bf16[3,256,256], index: 1, kind: input, shape index: {}]
  %s2 = inlined_call_operand.vmem [shape: f32[3,1,256], index: 2, kind: input, shape index: {}]
  %s3 = inlined_call_operand.hbm [shape: bf16[256,128], index: 3, kind: input, shape index: {}]
  %s4 = inlined_call_operand.vmem [shape: f32[1,128], index: 4, kind: input, shape index: {}]
  %s5 = inlined_call_operand.hbm [shape: f32[8,128], index: 5, kind: output, shape index: {0}]
  %s6 = inlined_call_operand.hbm [shape: f32[1,128], index: 6, kind: output, shape index: {1}]
  %7 = xla_tuple %s5, %s6
  %s8 = sld [smem:[#allocation0]]
  $region50: #{tpu_custom_call.1} parent=0
    _
  %s10 = ssub.s32 1, %s8
  %s11 = scalar_select 0, %s10, %s8
  $region1: #{tpu_custom_call.1} parent=0
    #allocation2 [shape = 'u8[8192]{0}', space=vmem, size = 0x2000, scoped, tag = 'input window, operand 0, single buffered']
    #allocation3 [shape = 's32[1]{0}', space=sflag, size = 0x4, scoped, tag = 'scoped memory for tpu_custom_call.1']
    #allocation4 [shape = 's32[1]{0}', space=sflag, size = 0x4, scoped, tag = 'scoped memory for tpu_custom_call.1']
    #allocation5 [shape = 'u8[393216]{0}', space=vmem, size = 0x60000, scoped, tag = 'input window, operand 1, single buffered']
    #allocation6 [shape = 's32[1]{0}', space=sflag, size = 0x4, scoped, tag = 'scoped memory for tpu_custom_call.1']
    #allocation7 [shape = 'u8[65536]{0}', space=vmem, size = 0x10000, scoped, tag = 'input window, operand 3, single buffered']
    #allocation8 [shape = 'u8[4096]{0}', space=vmem, size = 0x1000, scoped, tag = 'output window, operand 0, single buffered']
    #allocation9 [shape = 'u8[512]{0}', space=vmem, size = 0x400, scoped, tag = 'output window, operand 1, single buffered']
    #allocation10 [shape = 's32[1]{0}', space=sflag, size = 0x4, scoped, tag = 'scoped memory for tpu_custom_call.1']
    %12 = vsyncpa [#allocation3], 0
    %13 = vsyncpa [#allocation6], 0
    %14 = vsyncpa [#allocation4], 0
    %15 = vsyncpa [#allocation10], 0
    // Predicated region
    $region2: #{tpu_custom_call.1} parent=1 // pred_check
      _
    $region3: #{tpu_custom_call.1} parent=1 // pred_check_branch
      %17 = sbr.rel (0) target = $region5
    $region4: #{tpu_custom_call.1} parent=1 // pred_region
      %s19 = ssub.s32 256, 256
      %20 = vsyncadd [#allocation3], %s19
      %s22 = sshll.u32 [#allocation2], 4
      %s23 = int_to_ptr.vmem [resolvable:$true] %s22
      %25 = dma.hbm_to_vmem [thread:$0]  %s0, 256, %s23, [#allocation3]
    $region5: #{tpu_custom_call.1} parent=1 // pred_fallthru
      _
    // Predicated region
    $region6: #{tpu_custom_call.1} parent=1 // pred_check
      _
    $region7: #{tpu_custom_call.1} parent=1 // pred_check_branch
      %27 = sbr.rel (0) target = $region9
    $region8: #{tpu_custom_call.1} parent=1 // pred_region
      %s29 = ssub.s32 12288, 12288
      %30 = vsyncadd [#allocation6], %s29
      %s31 = sshll.u32 [#allocation5], 4
      %s32 = int_to_ptr.vmem [resolvable:$true] %s31
      %37 = dma.hbm_to_vmem [thread:$0]  %s1, 12288, %s32, [#allocation6], 128, 128, 8
    $region9: #{tpu_custom_call.1} parent=1 // pred_fallthru
      _
    // Predicated region
    $region10: #{tpu_custom_call.1} parent=1 // pred_check
      _
    $region11: #{tpu_custom_call.1} parent=1 // pred_check_branch
      %39 = sbr.rel (0) target = $region13
    $region12: #{tpu_custom_call.1} parent=1 // pred_region
      _
    $region13: #{tpu_custom_call.1} parent=1 // pred_fallthru
      _
    // Predicated region
    $region14: #{tpu_custom_call.1} parent=1 // pred_check
      _
    $region15: #{tpu_custom_call.1} parent=1 // pred_check_branch
      %41 = sbr.rel (0) target = $region17
    $region16: #{tpu_custom_call.1} parent=1 // pred_region
      %s43 = ssub.s32 2048, 2048
      %44 = vsyncadd [#allocation6], %s43
      %s45 = sshll.u32 [#allocation7], 4
      %s46 = int_to_ptr.vmem [resolvable:$true] %s45
      %51 = dma.hbm_to_vmem [thread:$0]  %s3, 2048, %s46, [#allocation6], 64, 64, 4
    $region17: #{tpu_custom_call.1} parent=1 // pred_fallthru
      _
    // Predicated region
    $region18: #{tpu_custom_call.1} parent=1 // pred_check
      _
    $region19: #{tpu_custom_call.1} parent=1 // pred_check_branch
      %53 = sbr.rel (0) target = $region21
    $region20: #{tpu_custom_call.1} parent=1 // pred_region
      _
    $region21: #{tpu_custom_call.1} parent=1 // pred_fallthru
      _
    // Predicated region
    $region22: #{tpu_custom_call.1} parent=1 // pred_check
      _
    $region23: #{tpu_custom_call.1} parent=1 // pred_check_branch
      %55 = sbr.rel (0) target = $region25
    $region24: #{tpu_custom_call.1} parent=1 // pred_region
      %56 = dma.done [#allocation3], 256
    $region25: #{tpu_custom_call.1} parent=1 // pred_fallthru
      _
    // Predicated region
    $region26: #{tpu_custom_call.1} parent=1 // pred_check
      _
    $region27: #{tpu_custom_call.1} parent=1 // pred_check_branch
      %58 = sbr.rel (0) target = $region29
    $region28: #{tpu_custom_call.1} parent=1 // pred_region
      %59 = dma.done [#allocation6], 12288
    $region29: #{tpu_custom_call.1} parent=1 // pred_fallthru
      _
    // Predicated region
    $region30: #{tpu_custom_call.1} parent=1 // pred_check
      _
    $region31: #{tpu_custom_call.1} parent=1 // pred_check_branch
      %61 = sbr.rel (0) target = $region33
    $region32: #{tpu_custom_call.1} parent=1 // pred_region
      %62 = dma.done [#allocation6], 2048
    $region33: #{tpu_custom_call.1} parent=1 // pred_fallthru
      _
    %v64 = vlaneseq
    %v65 = vshrl.u32 %v64, 7
    %vm66 = vcmp.lt.s32.totalorder %v65, 2
    %v67 = vsel %vm66, 1, 0
    %v68 = vcvt.s32.f32 %v67
    %v69 = vld [vmem:[#allocation2] sm:$0xff]
    %v70 = vld [vmem:[#allocation2 + $0x8] sm:$0xff]
    %v71 = vand.u32 2147483647, %v69
    %v72 = vand.u32 2147483647, %v70
    %v73 = vadd.f32 %v71, %v72
    %74 = vadd.xlane.f32.xlu0 %v73
    %v75 = vpop.xlane.xlu0 %74
    %v76 = vrot.slane %v75, 4
    %v77 = vadd.f32 %v75, %v76
    %v78 = vrot.slane %v77, 2
    %v79 = vadd.f32 %v77, %v78
    %v80 = vrot.slane %v79, 1
    %v81 = vadd.f32 %v79, %v80
    %s82 = vtos %v81
    %s83 = smul.f32 %s82, 0.001953125
    %p84 = scmp.gt.f32.partialorder %s83, 0.1
    %v85 = vld [vmem:[#allocation5] sm:$0xff]
    %v86 = vld [vmem:[#allocation5 + $0x8] sm:$0xff]
    %v87 = vld [vmem:[#allocation5 + $0x10] sm:$0xff]
    %v88 = vld [vmem:[#allocation5 + $0x18] sm:$0xff]
    %v89 = vld [vmem:[#allocation5 + $0x20] sm:$0xff]
    %v90 = vld [vmem:[#allocation5 + $0x28] sm:$0xff]
    %v91 = vld [vmem:[#allocation5 + $0x30] sm:$0xff]
    %v92 = vld [vmem:[#allocation5 + $0x38] sm:$0xff]
    %v93 = vld [vmem:[#allocation5 + $0x40] sm:$0xff]
    %v94 = vld [vmem:[#allocation5 + $0x48] sm:$0xff]
    %v95 = vld [vmem:[#allocation5 + $0x50] sm:$0xff]
    %v96 = vld [vmem:[#allocation5 + $0x58] sm:$0xff]
    %v97 = vld [vmem:[#allocation5 + $0x60] sm:$0xff]
    %v98 = vld [vmem:[#allocation5 + $0x68] sm:$0xff]
    %v99 = vld [vmem:[#allocation5 + $0x70] sm:$0xff]
    %v100 = vld [vmem:[#allocation5 + $0x78] sm:$0xff]
    %v101 = vld [vmem:[#allocation5 + $0x80] sm:$0xff]
    %v102 = vld [vmem:[#allocation5 + $0x88] sm:$0xff]
    %v103 = vld [vmem:[#allocation5 + $0x90] sm:$0xff]
    %v104 = vld [vmem:[#allocation5 + $0x98] sm:$0xff]
    %v105 = vld [vmem:[#allocation5 + $0xa0] sm:$0xff]
    %v106 = vld [vmem:[#allocation5 + $0xa8] sm:$0xff]
    %v107 = vld [vmem:[#allocation5 + $0xb0] sm:$0xff]
    %v108 = vld [vmem:[#allocation5 + $0xb8] sm:$0xff]
    %v109 = vld [vmem:[#allocation5 + $0xc0] sm:$0xff]
    %v110 = vld [vmem:[#allocation5 + $0xc8] sm:$0xff]
    %v111 = vld [vmem:[#allocation5 + $0xd0] sm:$0xff]
    %v112 = vld [vmem:[#allocation5 + $0xd8] sm:$0xff]
    %v113 = vld [vmem:[#allocation5 + $0xe0] sm:$0xff]
    %v114 = vld [vmem:[#allocation5 + $0xe8] sm:$0xff]
    %v115 = vld [vmem:[#allocation5 + $0xf0] sm:$0xff]
    %v116 = vld [vmem:[#allocation5 + $0xf8] sm:$0xff]
    %v117 = vpack.c.bf16 %v69, %v69
    %v118 = vpack.c.bf16 %v70, %v70
    %v119 = vld [vmem:[%s2] sm:$0x3]
    %v121 = vlaneseq
    %v122 = vshrl.u32 %v121, 7
    %v123 = vsub.s32 0, %v122
    %v124 = vrot.slane %v119, %v123
    %v125 = vlaneseq
    %v126 = vshrl.u32 %v125, 7
    %v127 = vsub.s32 1, %v126
    %v128 = vrot.slane %v119, %v127
    %v163 = vunpack.c.l.b16 %v85
    %v164 = vunpack.c.h.b16 %v85
    %v165 = vunpack.c.l.b16 %v86
    %v166 = vunpack.c.h.b16 %v86
    %v167 = vunpack.c.l.b16 %v87
    %v168 = vunpack.c.h.b16 %v87
    %v169 = vunpack.c.l.b16 %v88
    %v170 = vunpack.c.h.b16 %v88
    %v171 = vunpack.c.l.b16 %v89
    %v172 = vunpack.c.h.b16 %v89
    %v173 = vunpack.c.l.b16 %v90
    %v174 = vunpack.c.h.b16 %v90
    %v175 = vunpack.c.l.b16 %v91
    %v176 = vunpack.c.h.b16 %v91
    %v177 = vunpack.c.l.b16 %v92
    %v178 = vunpack.c.h.b16 %v92
    %v179 = vunpack.c.l.b16 %v93
    %v180 = vunpack.c.h.b16 %v93
    %v181 = vunpack.c.l.b16 %v94
    %v182 = vunpack.c.h.b16 %v94
    %v183 = vunpack.c.l.b16 %v95
    %v184 = vunpack.c.h.b16 %v95
    %v185 = vunpack.c.l.b16 %v96
    %v186 = vunpack.c.h.b16 %v96
    %v187 = vunpack.c.l.b16 %v97
    %v188 = vunpack.c.h.b16 %v97
    %v189 = vunpack.c.l.b16 %v98
    %v190 = vunpack.c.h.b16 %v98
    %v191 = vunpack.c.l.b16 %v99
    %v192 = vunpack.c.h.b16 %v99
    %v193 = vunpack.c.l.b16 %v100
    %v194 = vunpack.c.h.b16 %v100
    %v195 = vunpack.c.l.b16 %v101
    %v196 = vunpack.c.h.b16 %v101
    %v197 = vunpack.c.l.b16 %v102
    %v198 = vunpack.c.h.b16 %v102
    %v199 = vunpack.c.l.b16 %v103
    %v200 = vunpack.c.h.b16 %v103
    %v201 = vunpack.c.l.b16 %v104
    %v202 = vunpack.c.h.b16 %v104
    %v203 = vunpack.c.l.b16 %v105
    %v204 = vunpack.c.h.b16 %v105
    %v205 = vunpack.c.l.b16 %v106
    %v206 = vunpack.c.h.b16 %v106
    %v207 = vunpack.c.l.b16 %v107
    %v208 = vunpack.c.h.b16 %v107
    %v209 = vunpack.c.l.b16 %v108
    %v210 = vunpack.c.h.b16 %v108
    %v211 = vunpack.c.l.b16 %v109
    %v212 = vunpack.c.h.b16 %v109
    %v213 = vunpack.c.l.b16 %v110
    %v214 = vunpack.c.h.b16 %v110
    %v215 = vunpack.c.l.b16 %v111
    %v216 = vunpack.c.h.b16 %v111
    %v217 = vunpack.c.l.b16 %v112
    %v218 = vunpack.c.h.b16 %v112
    %v219 = vunpack.c.l.b16 %v113
    %v220 = vunpack.c.h.b16 %v113
    %v221 = vunpack.c.l.b16 %v114
    %v222 = vunpack.c.h.b16 %v114
    %v223 = vunpack.c.l.b16 %v115
    %v224 = vunpack.c.h.b16 %v115
    %v225 = vunpack.c.l.b16 %v116
    %v226 = vunpack.c.h.b16 %v116
    %v227 = vpack.c.b16 %v165, %v163
    %v228 = vpack.c.b16 %v166, %v164
    %v229 = vpack.c.b16 %v169, %v167
    %v230 = vpack.c.b16 %v170, %v168
    %v231 = vpack.c.b16 %v173, %v171
    %v232 = vpack.c.b16 %v174, %v172
    %v233 = vpack.c.b16 %v177, %v175
    %v234 = vpack.c.b16 %v178, %v176
    %v235 = vpack.c.b16 %v181, %v179
    %v236 = vpack.c.b16 %v182, %v180
    %v237 = vpack.c.b16 %v185, %v183
    %v238 = vpack.c.b16 %v186, %v184
    %v239 = vpack.c.b16 %v189, %v187
    %v240 = vpack.c.b16 %v190, %v188
    %v241 = vpack.c.b16 %v193, %v191
    %v242 = vpack.c.b16 %v194, %v192
    %v243 = vpack.c.b16 %v197, %v195
    %v244 = vpack.c.b16 %v198, %v196
    %v245 = vpack.c.b16 %v201, %v199
    %v246 = vpack.c.b16 %v202, %v200
    %v247 = vpack.c.b16 %v205, %v203
    %v248 = vpack.c.b16 %v206, %v204
    %v249 = vpack.c.b16 %v209, %v207
    %v250 = vpack.c.b16 %v210, %v208
    %v251 = vpack.c.b16 %v213, %v211
    %v252 = vpack.c.b16 %v214, %v212
    %v253 = vpack.c.b16 %v217, %v215
    %v254 = vpack.c.b16 %v218, %v216
    %v255 = vpack.c.b16 %v221, %v219
    %v256 = vpack.c.b16 %v222, %v220
    %v257 = vpack.c.b16 %v225, %v223
    %v258 = vpack.c.b16 %v226, %v224
    %291 = vmatprep.subr.bf16.mxu0 %v228
    %292 = vmatpush1.bf16.msra.mxu0 %v227
    %293 = vmatprep.subr.bf16.mxu0 %v230
    %294 = vmatpush1.bf16.msra.mxu0 %v229
    %295 = vmatprep.subr.bf16.mxu0 %v232
    %296 = vmatpush1.bf16.msra.mxu0 %v231
    %297 = vmatprep.subr.bf16.mxu0 %v234
    %298 = vmatpush1.bf16.msra.mxu0 %v233
    %299 = vmatprep.subr.bf16.mxu0 %v236
    %300 = vmatpush1.bf16.msra.mxu0 %v235
    %301 = vmatprep.subr.bf16.mxu0 %v238
    %302 = vmatpush1.bf16.msra.mxu0 %v237
    %303 = vmatprep.subr.bf16.mxu0 %v240
    %304 = vmatpush1.bf16.msra.mxu0 %v239
    %305 = vmatprep.subr.bf16.mxu0 %v242
    %306 = vmatpush1.bf16.msra.mxu0 %v241
    %307 = vmatprep.subr.bf16.mxu0 %v244
    %308 = vmatpush1.bf16.msra.mxu0 %v243
    %309 = vmatprep.subr.bf16.mxu0 %v246
    %310 = vmatpush1.bf16.msra.mxu0 %v245
    %311 = vmatprep.subr.bf16.mxu0 %v248
    %312 = vmatpush1.bf16.msra.mxu0 %v247
    %313 = vmatprep.subr.bf16.mxu0 %v250
    %314 = vmatpush1.bf16.msra.mxu0 %v249
    %315 = vmatprep.subr.bf16.mxu0 %v252
    %316 = vmatpush1.bf16.msra.mxu0 %v251
    %317 = vmatprep.subr.bf16.mxu0 %v254
    %318 = vmatpush1.bf16.msra.mxu0 %v253
    %319 = vmatprep.subr.bf16.mxu0 %v256
    %320 = vmatpush1.bf16.msra.mxu0 %v255
    %321 = vmatprep.subr.bf16.mxu0 %v258
    %322 = vmatpush1.bf16.msra.mxu0 %v257
    %323 = vmatprep.mubr.bf16.mxu0 %v118
    %324 = vmatmul.mubr.bf16.gmra.mrb[0].mxu0 %v117
    %v325 = vpop.f32.mrb[0].mxu0
    %v326 = vadd.f32 %v124, %v325
    %v327 = vpop.f32.mrb[0].mxu0
    %v328 = vadd.f32 %v128, %v327
    %v329 = vpop.f32.mrb[0].mxu0
    %v330 = vpop.f32.mrb[0].mxu0
    %331 = vdwg.mxu0
    %v332 = vmax.f32 %v326, 0.0
    %v333 = vmax.f32 %v328, 0.0
    %v334 = vmul.f32 %v332, %v68
    %v335 = vmul.f32 %v333, %v68
    %v336 = vand.u32 2147483647, %v334
    %v337 = vand.u32 2147483647, %v335
    %v338 = vadd.f32 %v336, %v337
    %339 = vadd.xlane.f32.xlu0 %v338
    %v340 = vpop.xlane.xlu0 %339
    %v341 = vrot.slane %v340, 4
    %v342 = vadd.f32 %v340, %v341
    %v343 = vrot.slane %v342, 2
    %v344 = vadd.f32 %v342, %v343
    %v345 = vrot.slane %v344, 1
    %v346 = vadd.f32 %v344, %v345
    %s347 = vtos %v346
    %s348 = smul.f32 %s347, 0.001953125
    %s349 = scalar_select %p84, 1, 0
    %v350 = vstv %s349
    %vm351 = vcmp.eq.s32.totalorder %v350, 1
    %v352 = vsel %vm351, %v69, %v334
    %v353 = vsel %vm351, %v70, %v335
    %s354 = scalar_select %p84, %s83, %s348
    %s355 = scalar_select %p84, 1.0, 0.0
    %s356 = sadd.f32 %s355, 0.0
    %p357 = scmp.gt.f32.partialorder %s354, 0.1
    %s358 = scalar_lea.vmem [#allocation5], 256
    %v359 = vld [vmem:[%s358] sm:$0xff]
    %v360 = vld [vmem:[%s358 + $0x8] sm:$0xff]
    %v361 = vld [vmem:[%s358 + $0x10] sm:$0xff]
    %v362 = vld [vmem:[%s358 + $0x18] sm:$0xff]
    %v363 = vld [vmem:[%s358 + $0x20] sm:$0xff]
    %v364 = vld [vmem:[%s358 + $0x28] sm:$0xff]
    %v365 = vld [vmem:[%s358 + $0x30] sm:$0xff]
    %v366 = vld [vmem:[%s358 + $0x38] sm:$0xff]
    %v367 = vld [vmem:[%s358 + $0x40] sm:$0xff]
    %v368 = vld [vmem:[%s358 + $0x48] sm:$0xff]
    %v369 = vld [vmem:[%s358 + $0x50] sm:$0xff]
    %v370 = vld [vmem:[%s358 + $0x58] sm:$0xff]
    %v371 = vld [vmem:[%s358 + $0x60] sm:$0xff]
    %v372 = vld [vmem:[%s358 + $0x68] sm:$0xff]
    %v373 = vld [vmem:[%s358 + $0x70] sm:$0xff]
    %v374 = vld [vmem:[%s358 + $0x78] sm:$0xff]
    %v375 = vld [vmem:[%s358 + $0x80] sm:$0xff]
    %v376 = vld [vmem:[%s358 + $0x88] sm:$0xff]
    %v377 = vld [vmem:[%s358 + $0x90] sm:$0xff]
    %v378 = vld [vmem:[%s358 + $0x98] sm:$0xff]
    %v379 = vld [vmem:[%s358 + $0xa0] sm:$0xff]
    %v380 = vld [vmem:[%s358 + $0xa8] sm:$0xff]
    %v381 = vld [vmem:[%s358 + $0xb0] sm:$0xff]
    %v382 = vld [vmem:[%s358 + $0xb8] sm:$0xff]
    %v383 = vld [vmem:[%s358 + $0xc0] sm:$0xff]
    %v384 = vld [vmem:[%s358 + $0xc8] sm:$0xff]
    %v385 = vld [vmem:[%s358 + $0xd0] sm:$0xff]
    %v386 = vld [vmem:[%s358 + $0xd8] sm:$0xff]
    %v387 = vld [vmem:[%s358 + $0xe0] sm:$0xff]
    %v388 = vld [vmem:[%s358 + $0xe8] sm:$0xff]
    %v389 = vld [vmem:[%s358 + $0xf0] sm:$0xff]
    %v390 = vld [vmem:[%s358 + $0xf8] sm:$0xff]
    %v391 = vpack.c.bf16 %v352, %v352
    %v392 = vpack.c.bf16 %v353, %v353
    %s393 = scalar_lea.vmem %s2, 2
    %v394 = vld [vmem:[%s393] sm:$0x3]
    %v396 = vlaneseq
    %v397 = vshrl.u32 %v396, 7
    %v398 = vsub.s32 0, %v397
    %v399 = vrot.slane %v394, %v398
    %v400 = vlaneseq
    %v401 = vshrl.u32 %v400, 7
    %v402 = vsub.s32 1, %v401
    %v403 = vrot.slane %v394, %v402
    %v438 = vunpack.c.l.b16 %v359
    %v439 = vunpack.c.h.b16 %v359
    %v440 = vunpack.c.l.b16 %v360
    %v441 = vunpack.c.h.b16 %v360
    %v442 = vunpack.c.l.b16 %v361
    %v443 = vunpack.c.h.b16 %v361
    %v444 = vunpack.c.l.b16 %v362
    %v445 = vunpack.c.h.b16 %v362
    %v446 = vunpack.c.l.b16 %v363
    %v447 = vunpack.c.h.b16 %v363
    %v448 = vunpack.c.l.b16 %v364
    %v449 = vunpack.c.h.b16 %v364
    %v450 = vunpack.c.l.b16 %v365
    %v451 = vunpack.c.h.b16 %v365
    %v452 = vunpack.c.l.b16 %v366
    %v453 = vunpack.c.h.b16 %v366
    %v454 = vunpack.c.l.b16 %v367
    %v455 = vunpack.c.h.b16 %v367
    %v456 = vunpack.c.l.b16 %v368
    %v457 = vunpack.c.h.b16 %v368
    %v458 = vunpack.c.l.b16 %v369
    %v459 = vunpack.c.h.b16 %v369
    %v460 = vunpack.c.l.b16 %v370
    %v461 = vunpack.c.h.b16 %v370
    %v462 = vunpack.c.l.b16 %v371
    %v463 = vunpack.c.h.b16 %v371
    %v464 = vunpack.c.l.b16 %v372
    %v465 = vunpack.c.h.b16 %v372
    %v466 = vunpack.c.l.b16 %v373
    %v467 = vunpack.c.h.b16 %v373
    %v468 = vunpack.c.l.b16 %v374
    %v469 = vunpack.c.h.b16 %v374
    %v470 = vunpack.c.l.b16 %v375
    %v471 = vunpack.c.h.b16 %v375
    %v472 = vunpack.c.l.b16 %v376
    %v473 = vunpack.c.h.b16 %v376
    %v474 = vunpack.c.l.b16 %v377
    %v475 = vunpack.c.h.b16 %v377
    %v476 = vunpack.c.l.b16 %v378
    %v477 = vunpack.c.h.b16 %v378
    %v478 = vunpack.c.l.b16 %v379
    %v479 = vunpack.c.h.b16 %v379
    %v480 = vunpack.c.l.b16 %v380
    %v481 = vunpack.c.h.b16 %v380
    %v482 = vunpack.c.l.b16 %v381
    %v483 = vunpack.c.h.b16 %v381
    %v484 = vunpack.c.l.b16 %v382
    %v485 = vunpack.c.h.b16 %v382
    %v486 = vunpack.c.l.b16 %v383
    %v487 = vunpack.c.h.b16 %v383
    %v488 = vunpack.c.l.b16 %v384
    %v489 = vunpack.c.h.b16 %v384
    %v490 = vunpack.c.l.b16 %v385
    %v491 = vunpack.c.h.b16 %v385
    %v492 = vunpack.c.l.b16 %v386
    %v493 = vunpack.c.h.b16 %v386
    %v494 = vunpack.c.l.b16 %v387
    %v495 = vunpack.c.h.b16 %v387
    %v496 = vunpack.c.l.b16 %v388
    %v497 = vunpack.c.h.b16 %v388
    %v498 = vunpack.c.l.b16 %v389
    %v499 = vunpack.c.h.b16 %v389
    %v500 = vunpack.c.l.b16 %v390
    %v501 = vunpack.c.h.b16 %v390
    %v502 = vpack.c.b16 %v440, %v438
    %v503 = vpack.c.b16 %v441, %v439
    %v504 = vpack.c.b16 %v444, %v442
    %v505 = vpack.c.b16 %v445, %v443
    %v506 = vpack.c.b16 %v448, %v446
    %v507 = vpack.c.b16 %v449, %v447
    %v508 = vpack.c.b16 %v452, %v450
    %v509 = vpack.c.b16 %v453, %v451
    %v510 = vpack.c.b16 %v456, %v454
    %v511 = vpack.c.b16 %v457, %v455
    %v512 = vpack.c.b16 %v460, %v458
    %v513 = vpack.c.b16 %v461, %v459
    %v514 = vpack.c.b16 %v464, %v462
    %v515 = vpack.c.b16 %v465, %v463
    %v516 = vpack.c.b16 %v468, %v466
    %v517 = vpack.c.b16 %v469, %v467
    %v518 = vpack.c.b16 %v472, %v470
    %v519 = vpack.c.b16 %v473, %v471
    %v520 = vpack.c.b16 %v476, %v474
    %v521 = vpack.c.b16 %v477, %v475
    %v522 = vpack.c.b16 %v480, %v478
    %v523 = vpack.c.b16 %v481, %v479
    %v524 = vpack.c.b16 %v484, %v482
    %v525 = vpack.c.b16 %v485, %v483
    %v526 = vpack.c.b16 %v488, %v486
    %v527 = vpack.c.b16 %v489, %v487
    %v528 = vpack.c.b16 %v492, %v490
    %v529 = vpack.c.b16 %v493, %v491
    %v530 = vpack.c.b16 %v496, %v494
    %v531 = vpack.c.b16 %v497, %v495
    %v532 = vpack.c.b16 %v500, %v498
    %v533 = vpack.c.b16 %v501, %v499
    %566 = vmatprep.subr.bf16.mxu0 %v503
    %567 = vmatpush1.bf16.msra.mxu0 %v502
    %568 = vmatprep.subr.bf16.mxu0 %v505
    %569 = vmatpush1.bf16.msra.mxu0 %v504
    %570 = vmatprep.subr.bf16.mxu0 %v507
    %571 = vmatpush1.bf16.msra.mxu0 %v506
    %572 = vmatprep.subr.bf16.mxu0 %v509
    %573 = vmatpush1.bf16.msra.mxu0 %v508
    %574 = vmatprep.subr.bf16.mxu0 %v511
    %575 = vmatpush1.bf16.msra.mxu0 %v510
    %576 = vmatprep.subr.bf16.mxu0 %v513
    %577 = vmatpush1.bf16.msra.mxu0 %v512
    %578 = vmatprep.subr.bf16.mxu0 %v515
    %579 = vmatpush1.bf16.msra.mxu0 %v514
    %580 = vmatprep.subr.bf16.mxu0 %v517
    %581 = vmatpush1.bf16.msra.mxu0 %v516
    %582 = vmatprep.subr.bf16.mxu0 %v519
    %583 = vmatpush1.bf16.msra.mxu0 %v518
    %584 = vmatprep.subr.bf16.mxu0 %v521
    %585 = vmatpush1.bf16.msra.mxu0 %v520
    %586 = vmatprep.subr.bf16.mxu0 %v523
    %587 = vmatpush1.bf16.msra.mxu0 %v522
    %588 = vmatprep.subr.bf16.mxu0 %v525
    %589 = vmatpush1.bf16.msra.mxu0 %v524
    %590 = vmatprep.subr.bf16.mxu0 %v527
    %591 = vmatpush1.bf16.msra.mxu0 %v526
    %592 = vmatprep.subr.bf16.mxu0 %v529
    %593 = vmatpush1.bf16.msra.mxu0 %v528
    %594 = vmatprep.subr.bf16.mxu0 %v531
    %595 = vmatpush1.bf16.msra.mxu0 %v530
    %596 = vmatprep.subr.bf16.mxu0 %v533
    %597 = vmatpush1.bf16.msra.mxu0 %v532
    %598 = vmatprep.mubr.bf16.mxu0 %v392
    %599 = vmatmul.mubr.bf16.gmra.mrb[0].mxu0 %v391
    %v600 = vpop.f32.mrb[0].mxu0
    %v601 = vadd.f32 %v399, %v600
    %v602 = vpop.f32.mrb[0].mxu0
    %v603 = vadd.f32 %v403, %v602
    %v604 = vpop.f32.mrb[0].mxu0
    %v605 = vpop.f32.mrb[0].mxu0
    %606 = vdwg.mxu0
    %v607 = vmax.f32 %v601, 0.0
    %v608 = vmax.f32 %v603, 0.0
    %v609 = vmul.f32 %v607, %v68
    %v610 = vmul.f32 %v608, %v68
    %v611 = vand.u32 2147483647, %v609
    %v612 = vand.u32 2147483647, %v610
    %v613 = vadd.f32 %v611, %v612
    %614 = vadd.xlane.f32.xlu0 %v613
    %v615 = vpop.xlane.xlu0 %614
    %v616 = vrot.slane %v615, 4
    %v617 = vadd.f32 %v615, %v616
    %v618 = vrot.slane %v617, 2
    %v619 = vadd.f32 %v617, %v618
    %v620 = vrot.slane %v619, 1
    %v621 = vadd.f32 %v619, %v620
    %s622 = vtos %v621
    %s623 = smul.f32 %s622, 0.001953125
    %s624 = scalar_select %p357, 1, 0
    %v625 = vstv %s624
    %vm626 = vcmp.eq.s32.totalorder %v625, 1
    %v627 = vsel %vm626, %v352, %v609
    %v628 = vsel %vm626, %v353, %v610
    %s629 = scalar_select %p357, %s354, %s623
    %s630 = scalar_select %p357, 1.0, 0.0
    %s631 = sadd.f32 %s356, %s630
    %p632 = scmp.gt.f32.partialorder %s629, 0.1
    %s633 = scalar_lea.vmem [#allocation5], 512
    %v634 = vld [vmem:[%s633] sm:$0xff]
    %v635 = vld [vmem:[%s633 + $0x8] sm:$0xff]
    %v636 = vld [vmem:[%s633 + $0x10] sm:$0xff]
    %v637 = vld [vmem:[%s633 + $0x18] sm:$0xff]
    %v638 = vld [vmem:[%s633 + $0x20] sm:$0xff]
    %v639 = vld [vmem:[%s633 + $0x28] sm:$0xff]
    %v640 = vld [vmem:[%s633 + $0x30] sm:$0xff]
    %v641 = vld [vmem:[%s633 + $0x38] sm:$0xff]
    %v642 = vld [vmem:[%s633 + $0x40] sm:$0xff]
    %v643 = vld [vmem:[%s633 + $0x48] sm:$0xff]
    %v644 = vld [vmem:[%s633 + $0x50] sm:$0xff]
    %v645 = vld [vmem:[%s633 + $0x58] sm:$0xff]
    %v646 = vld [vmem:[%s633 + $0x60] sm:$0xff]
    %v647 = vld [vmem:[%s633 + $0x68] sm:$0xff]
    %v648 = vld [vmem:[%s633 + $0x70] sm:$0xff]
    %v649 = vld [vmem:[%s633 + $0x78] sm:$0xff]
    %v650 = vld [vmem:[%s633 + $0x80] sm:$0xff]
    %v651 = vld [vmem:[%s633 + $0x88] sm:$0xff]
    %v652 = vld [vmem:[%s633 + $0x90] sm:$0xff]
    %v653 = vld [vmem:[%s633 + $0x98] sm:$0xff]
    %v654 = vld [vmem:[%s633 + $0xa0] sm:$0xff]
    %v655 = vld [vmem:[%s633 + $0xa8] sm:$0xff]
    %v656 = vld [vmem:[%s633 + $0xb0] sm:$0xff]
    %v657 = vld [vmem:[%s633 + $0xb8] sm:$0xff]
    %v658 = vld [vmem:[%s633 + $0xc0] sm:$0xff]
    %v659 = vld [vmem:[%s633 + $0xc8] sm:$0xff]
    %v660 = vld [vmem:[%s633 + $0xd0] sm:$0xff]
    %v661 = vld [vmem:[%s633 + $0xd8] sm:$0xff]
    %v662 = vld [vmem:[%s633 + $0xe0] sm:$0xff]
    %v663 = vld [vmem:[%s633 + $0xe8] sm:$0xff]
    %v664 = vld [vmem:[%s633 + $0xf0] sm:$0xff]
    %v665 = vld [vmem:[%s633 + $0xf8] sm:$0xff]
    %v666 = vpack.c.bf16 %v627, %v627
    %v667 = vpack.c.bf16 %v628, %v628
    %s668 = scalar_lea.vmem %s2, 4
    %v669 = vld [vmem:[%s668] sm:$0x3]
    %v671 = vlaneseq
    %v672 = vshrl.u32 %v671, 7
    %v673 = vsub.s32 0, %v672
    %v674 = vrot.slane %v669, %v673
    %v675 = vlaneseq
    %v676 = vshrl.u32 %v675, 7
    %v677 = vsub.s32 1, %v676
    %v678 = vrot.slane %v669, %v677
    %v713 = vunpack.c.l.b16 %v634
    %v714 = vunpack.c.h.b16 %v634
    %v715 = vunpack.c.l.b16 %v635
    %v716 = vunpack.c.h.b16 %v635
    %v717 = vunpack.c.l.b16 %v636
    %v718 = vunpack.c.h.b16 %v636
    %v719 = vunpack.c.l.b16 %v637
    %v720 = vunpack.c.h.b16 %v637
    %v721 = vunpack.c.l.b16 %v638
    %v722 = vunpack.c.h.b16 %v638
    %v723 = vunpack.c.l.b16 %v639
    %v724 = vunpack.c.h.b16 %v639
    %v725 = vunpack.c.l.b16 %v640
    %v726 = vunpack.c.h.b16 %v640
    %v727 = vunpack.c.l.b16 %v641
    %v728 = vunpack.c.h.b16 %v641
    %v729 = vunpack.c.l.b16 %v642
    %v730 = vunpack.c.h.b16 %v642
    %v731 = vunpack.c.l.b16 %v643
    %v732 = vunpack.c.h.b16 %v643
    %v733 = vunpack.c.l.b16 %v644
    %v734 = vunpack.c.h.b16 %v644
    %v735 = vunpack.c.l.b16 %v645
    %v736 = vunpack.c.h.b16 %v645
    %v737 = vunpack.c.l.b16 %v646
    %v738 = vunpack.c.h.b16 %v646
    %v739 = vunpack.c.l.b16 %v647
    %v740 = vunpack.c.h.b16 %v647
    %v741 = vunpack.c.l.b16 %v648
    %v742 = vunpack.c.h.b16 %v648
    %v743 = vunpack.c.l.b16 %v649
    %v744 = vunpack.c.h.b16 %v649
    %v745 = vunpack.c.l.b16 %v650
    %v746 = vunpack.c.h.b16 %v650
    %v747 = vunpack.c.l.b16 %v651
    %v748 = vunpack.c.h.b16 %v651
    %v749 = vunpack.c.l.b16 %v652
    %v750 = vunpack.c.h.b16 %v652
    %v751 = vunpack.c.l.b16 %v653
    %v752 = vunpack.c.h.b16 %v653
    %v753 = vunpack.c.l.b16 %v654
    %v754 = vunpack.c.h.b16 %v654
    %v755 = vunpack.c.l.b16 %v655
    %v756 = vunpack.c.h.b16 %v655
    %v757 = vunpack.c.l.b16 %v656
    %v758 = vunpack.c.h.b16 %v656
    %v759 = vunpack.c.l.b16 %v657
    %v760 = vunpack.c.h.b16 %v657
    %v761 = vunpack.c.l.b16 %v658
    %v762 = vunpack.c.h.b16 %v658
    %v763 = vunpack.c.l.b16 %v659
    %v764 = vunpack.c.h.b16 %v659
    %v765 = vunpack.c.l.b16 %v660
    %v766 = vunpack.c.h.b16 %v660
    %v767 = vunpack.c.l.b16 %v661
    %v768 = vunpack.c.h.b16 %v661
    %v769 = vunpack.c.l.b16 %v662
    %v770 = vunpack.c.h.b16 %v662
    %v771 = vunpack.c.l.b16 %v663
    %v772 = vunpack.c.h.b16 %v663
    %v773 = vunpack.c.l.b16 %v664
    %v774 = vunpack.c.h.b16 %v664
    %v775 = vunpack.c.l.b16 %v665
    %v776 = vunpack.c.h.b16 %v665
    %v777 = vpack.c.b16 %v715, %v713
    %v778 = vpack.c.b16 %v716, %v714
    %v779 = vpack.c.b16 %v719, %v717
    %v780 = vpack.c.b16 %v720, %v718
    %v781 = vpack.c.b16 %v723, %v721
    %v782 = vpack.c.b16 %v724, %v722
    %v783 = vpack.c.b16 %v727, %v725
    %v784 = vpack.c.b16 %v728, %v726
    %v785 = vpack.c.b16 %v731, %v729
    %v786 = vpack.c.b16 %v732, %v730
    %v787 = vpack.c.b16 %v735, %v733
    %v788 = vpack.c.b16 %v736, %v734
    %v789 = vpack.c.b16 %v739, %v737
    %v790 = vpack.c.b16 %v740, %v738
    %v791 = vpack.c.b16 %v743, %v741
    %v792 = vpack.c.b16 %v744, %v742
    %v793 = vpack.c.b16 %v747, %v745
    %v794 = vpack.c.b16 %v748, %v746
    %v795 = vpack.c.b16 %v751, %v749
    %v796 = vpack.c.b16 %v752, %v750
    %v797 = vpack.c.b16 %v755, %v753
    %v798 = vpack.c.b16 %v756, %v754
    %v799 = vpack.c.b16 %v759, %v757
    %v800 = vpack.c.b16 %v760, %v758
    %v801 = vpack.c.b16 %v763, %v761
    %v802 = vpack.c.b16 %v764, %v762
    %v803 = vpack.c.b16 %v767, %v765
    %v804 = vpack.c.b16 %v768, %v766
    %v805 = vpack.c.b16 %v771, %v769
    %v806 = vpack.c.b16 %v772, %v770
    %v807 = vpack.c.b16 %v775, %v773
    %v808 = vpack.c.b16 %v776, %v774
    %841 = vmatprep.subr.bf16.mxu0 %v778
    %842 = vmatpush1.bf16.msra.mxu0 %v777
    %843 = vmatprep.subr.bf16.mxu0 %v780
    %844 = vmatpush1.bf16.msra.mxu0 %v779
    %845 = vmatprep.subr.bf16.mxu0 %v782
    %846 = vmatpush1.bf16.msra.mxu0 %v781
    %847 = vmatprep.subr.bf16.mxu0 %v784
    %848 = vmatpush1.bf16.msra.mxu0 %v783
    %849 = vmatprep.subr.bf16.mxu0 %v786
    %850 = vmatpush1.bf16.msra.mxu0 %v785
    %851 = vmatprep.subr.bf16.mxu0 %v788
    %852 = vmatpush1.bf16.msra.mxu0 %v787
    %853 = vmatprep.subr.bf16.mxu0 %v790
    %854 = vmatpush1.bf16.msra.mxu0 %v789
    %855 = vmatprep.subr.bf16.mxu0 %v792
    %856 = vmatpush1.bf16.msra.mxu0 %v791
    %857 = vmatprep.subr.bf16.mxu0 %v794
    %858 = vmatpush1.bf16.msra.mxu0 %v793
    %859 = vmatprep.subr.bf16.mxu0 %v796
    %860 = vmatpush1.bf16.msra.mxu0 %v795
    %861 = vmatprep.subr.bf16.mxu0 %v798
    %862 = vmatpush1.bf16.msra.mxu0 %v797
    %863 = vmatprep.subr.bf16.mxu0 %v800
    %864 = vmatpush1.bf16.msra.mxu0 %v799
    %865 = vmatprep.subr.bf16.mxu0 %v802
    %866 = vmatpush1.bf16.msra.mxu0 %v801
    %867 = vmatprep.subr.bf16.mxu0 %v804
    %868 = vmatpush1.bf16.msra.mxu0 %v803
    %869 = vmatprep.subr.bf16.mxu0 %v806
    %870 = vmatpush1.bf16.msra.mxu0 %v805
    %871 = vmatprep.subr.bf16.mxu0 %v808
    %872 = vmatpush1.bf16.msra.mxu0 %v807
    %873 = vmatprep.mubr.bf16.mxu0 %v667
    %874 = vmatmul.mubr.bf16.gmra.mrb[0].mxu0 %v666
    %v875 = vpop.f32.mrb[0].mxu0
    %v876 = vadd.f32 %v674, %v875
    %v877 = vpop.f32.mrb[0].mxu0
    %v878 = vadd.f32 %v678, %v877
    %v879 = vpop.f32.mrb[0].mxu0
    %v880 = vpop.f32.mrb[0].mxu0
    %881 = vdwg.mxu0
    %v882 = vmax.f32 %v876, 0.0
    %v883 = vmax.f32 %v878, 0.0
    %v884 = vmul.f32 %v882, %v68
    %v885 = vmul.f32 %v883, %v68
    %s886 = scalar_select %p632, 1, 0
    %v887 = vstv %s886
    %vm888 = vcmp.eq.s32.totalorder %v887, 1
    %v889 = vsel %vm888, %v627, %v884
    %v890 = vsel %vm888, %v628, %v885
    %s891 = scalar_select %p632, 1.0, 0.0
    %s892 = sadd.f32 %s631, %s891
    %v893 = vpack.c.bf16 %v889, %v889
    %v894 = vpack.c.bf16 %v890, %v890
    %v895 = vld [vmem:[#allocation7] sm:$0xf]
    %v896 = vld [vmem:[#allocation7 + $0x4] sm:$0xf]
    %v897 = vld [vmem:[#allocation7 + $0x8] sm:$0xf]
    %v898 = vld [vmem:[#allocation7 + $0xc] sm:$0xf]
    %v899 = vld [vmem:[#allocation7 + $0x10] sm:$0xf]
    %v900 = vld [vmem:[#allocation7 + $0x14] sm:$0xf]
    %v901 = vld [vmem:[#allocation7 + $0x18] sm:$0xf]
    %v902 = vld [vmem:[#allocation7 + $0x1c] sm:$0xf]
    %v903 = vld [vmem:[#allocation7 + $0x20] sm:$0xf]
    %v904 = vld [vmem:[#allocation7 + $0x24] sm:$0xf]
    %v905 = vld [vmem:[#allocation7 + $0x28] sm:$0xf]
    %v906 = vld [vmem:[#allocation7 + $0x2c] sm:$0xf]
    %v907 = vld [vmem:[#allocation7 + $0x30] sm:$0xf]
    %v908 = vld [vmem:[#allocation7 + $0x34] sm:$0xf]
    %v909 = vld [vmem:[#allocation7 + $0x38] sm:$0xf]
    %v910 = vld [vmem:[#allocation7 + $0x3c] sm:$0xf]
    %v911 = vld [vmem:[#allocation7 + $0x40] sm:$0xf]
    %v912 = vld [vmem:[#allocation7 + $0x44] sm:$0xf]
    %v913 = vld [vmem:[#allocation7 + $0x48] sm:$0xf]
    %v914 = vld [vmem:[#allocation7 + $0x4c] sm:$0xf]
    %v915 = vld [vmem:[#allocation7 + $0x50] sm:$0xf]
    %v916 = vld [vmem:[#allocation7 + $0x54] sm:$0xf]
    %v917 = vld [vmem:[#allocation7 + $0x58] sm:$0xf]
    %v918 = vld [vmem:[#allocation7 + $0x5c] sm:$0xf]
    %v919 = vld [vmem:[#allocation7 + $0x60] sm:$0xf]
    %v920 = vld [vmem:[#allocation7 + $0x64] sm:$0xf]
    %v921 = vld [vmem:[#allocation7 + $0x68] sm:$0xf]
    %v922 = vld [vmem:[#allocation7 + $0x6c] sm:$0xf]
    %v923 = vld [vmem:[#allocation7 + $0x70] sm:$0xf]
    %v924 = vld [vmem:[#allocation7 + $0x74] sm:$0xf]
    %v925 = vld [vmem:[#allocation7 + $0x78] sm:$0xf]
    %v926 = vld [vmem:[#allocation7 + $0x7c] sm:$0xf]
    %v927 = vld [vmem:[%s4] sm:$0x1]
    %v929 = vlaneseq
    %v930 = vshrl.u32 %v929, 7
    %v931 = vsub.s32 0, %v930
    %v932 = vrot.slane %v927, %v931
    %v966 = vunpack.c.l.b16 %v895
    %v967 = vunpack.c.l.b16 %v896
    %v968 = vunpack.c.l.b16 %v897
    %v969 = vunpack.c.l.b16 %v898
    %v970 = vunpack.c.l.b16 %v899
    %v971 = vunpack.c.l.b16 %v900
    %v972 = vunpack.c.l.b16 %v901
    %v973 = vunpack.c.l.b16 %v902
    %v974 = vunpack.c.l.b16 %v903
    %v975 = vunpack.c.l.b16 %v904
    %v976 = vunpack.c.l.b16 %v905
    %v977 = vunpack.c.l.b16 %v906
    %v978 = vunpack.c.l.b16 %v907
    %v979 = vunpack.c.l.b16 %v908
    %v980 = vunpack.c.l.b16 %v909
    %v981 = vunpack.c.l.b16 %v910
    %v982 = vunpack.c.l.b16 %v911
    %v983 = vunpack.c.l.b16 %v912
    %v984 = vunpack.c.l.b16 %v913
    %v985 = vunpack.c.l.b16 %v914
    %v986 = vunpack.c.l.b16 %v915
    %v987 = vunpack.c.l.b16 %v916
    %v988 = vunpack.c.l.b16 %v917
    %v989 = vunpack.c.l.b16 %v918
    %v990 = vunpack.c.l.b16 %v919
    %v991 = vunpack.c.l.b16 %v920
    %v992 = vunpack.c.l.b16 %v921
    %v993 = vunpack.c.l.b16 %v922
    %v994 = vunpack.c.l.b16 %v923
    %v995 = vunpack.c.l.b16 %v924
    %v996 = vunpack.c.l.b16 %v925
    %v997 = vunpack.c.l.b16 %v926
    %v998 = vpack.c.b16 %v967, %v966
    %v999 = vpack.c.b16 %v969, %v968
    %v1000 = vpack.c.b16 %v971, %v970
    %v1001 = vpack.c.b16 %v973, %v972
    %v1002 = vpack.c.b16 %v975, %v974
    %v1003 = vpack.c.b16 %v977, %v976
    %v1004 = vpack.c.b16 %v979, %v978
    %v1005 = vpack.c.b16 %v981, %v980
    %v1006 = vpack.c.b16 %v983, %v982
    %v1007 = vpack.c.b16 %v985, %v984
    %v1008 = vpack.c.b16 %v987, %v986
    %v1009 = vpack.c.b16 %v989, %v988
    %v1010 = vpack.c.b16 %v991, %v990
    %v1011 = vpack.c.b16 %v993, %v992
    %v1012 = vpack.c.b16 %v995, %v994
    %v1013 = vpack.c.b16 %v997, %v996
    %1030 = vmatprep.subr.bf16.mxu0 0
    %1031 = vmatpush1.bf16.msra.mxu0 %v998
    %1032 = vmatprep.subr.bf16.mxu0 0
    %1033 = vmatpush1.bf16.msra.mxu0 %v999
    %1034 = vmatprep.subr.bf16.mxu0 0
    %1035 = vmatpush1.bf16.msra.mxu0 %v1000
    %1036 = vmatprep.subr.bf16.mxu0 0
    %1037 = vmatpush1.bf16.msra.mxu0 %v1001
    %1038 = vmatprep.subr.bf16.mxu0 0
    %1039 = vmatpush1.bf16.msra.mxu0 %v1002
    %1040 = vmatprep.subr.bf16.mxu0 0
    %1041 = vmatpush1.bf16.msra.mxu0 %v1003
    %1042 = vmatprep.subr.bf16.mxu0 0
    %1043 = vmatpush1.bf16.msra.mxu0 %v1004
    %1044 = vmatprep.subr.bf16.mxu0 0
    %1045 = vmatpush1.bf16.msra.mxu0 %v1005
    %1046 = vmatprep.subr.bf16.mxu0 0
    %1047 = vmatpush1.bf16.msra.mxu0 %v1006
    %1048 = vmatprep.subr.bf16.mxu0 0
    %1049 = vmatpush1.bf16.msra.mxu0 %v1007
    %1050 = vmatprep.subr.bf16.mxu0 0
    %1051 = vmatpush1.bf16.msra.mxu0 %v1008
    %1052 = vmatprep.subr.bf16.mxu0 0
    %1053 = vmatpush1.bf16.msra.mxu0 %v1009
    %1054 = vmatprep.subr.bf16.mxu0 0
    %1055 = vmatpush1.bf16.msra.mxu0 %v1010
    %1056 = vmatprep.subr.bf16.mxu0 0
    %1057 = vmatpush1.bf16.msra.mxu0 %v1011
    %1058 = vmatprep.subr.bf16.mxu0 0
    %1059 = vmatpush1.bf16.msra.mxu0 %v1012
    %1060 = vmatprep.subr.bf16.mxu0 0
    %1061 = vmatpush1.bf16.msra.mxu0 %v1013
    %1062 = vmatprep.mubr.bf16.mxu0 %v894
    %1063 = vmatmul.mubr.bf16.gmra.mrb[0].mxu0 %v893
    %v1064 = vpop.f32.mrb[0].mxu0
    %v1065 = vadd.f32 %v932, %v1064
    %v1066 = vpop.f32.mrb[0].mxu0
    %v1067 = vpop.f32.mrb[0].mxu0
    %v1068 = vpop.f32.mrb[0].mxu0
    %1069 = vdwg.mxu0
    %1070 = vst [vmem:[#allocation8] sm:$0xff] %v1065
    %s1071 = smul.f32 %s892, 0.33333334
    %v1072 = vstv %s1071
    %1073 = vst [vmem:[#allocation9] sm:$0x1] %v1072
    // Predicated region
    $region34: #{tpu_custom_call.1} parent=1 // pred_check
      _
    $region35: #{tpu_custom_call.1} parent=1 // pred_check_branch
      %1075 = sbr.rel (0) target = $region37
    $region36: #{tpu_custom_call.1} parent=1 // pred_region
      %s1077 = ssub.s32 128, 128
      %1078 = vsyncadd [#allocation4], %s1077
      %s1080 = sshll.u32 [#allocation8], 4
      %s1081 = int_to_ptr.vmem [resolvable:$true] %s1080
      %1083 = dma.vmem_to_hbm [thread:$0]  %s1081, 128, %s5, [#allocation4]
    $region37: #{tpu_custom_call.1} parent=1 // pred_fallthru
      _
    // Predicated region
    $region38: #{tpu_custom_call.1} parent=1 // pred_check
      _
    $region39: #{tpu_custom_call.1} parent=1 // pred_check_branch
      %1085 = sbr.rel (0) target = $region41
    $region40: #{tpu_custom_call.1} parent=1 // pred_region
      %s1087 = ssub.s32 16, 16
      %1088 = vsyncadd [#allocation10], %s1087
      %s1090 = sshll.u32 [#allocation9], 4
      %s1091 = int_to_ptr.vmem [resolvable:$true] %s1090
      %1093 = dma.vmem_to_hbm [thread:$0]  %s1091, 16, %s6, [#allocation10]
    $region41: #{tpu_custom_call.1} parent=1 // pred_fallthru
      _
    // Predicated region
    $region42: #{tpu_custom_call.1} parent=1 // pred_check
      _
    $region43: #{tpu_custom_call.1} parent=1 // pred_check_branch
      %1095 = sbr.rel (0) target = $region45
    $region44: #{tpu_custom_call.1} parent=1 // pred_region
      %1096 = dma.done [#allocation4], 128
    $region45: #{tpu_custom_call.1} parent=1 // pred_fallthru
      _
    // Predicated region
    $region46: #{tpu_custom_call.1} parent=1 // pred_check
      _
    $region47: #{tpu_custom_call.1} parent=1 // pred_check_branch
      %1098 = sbr.rel (0) target = $region49
    $region48: #{tpu_custom_call.1} parent=1 // pred_region
      %1099 = dma.done [#allocation10], 16
    $region49: #{tpu_custom_call.1} parent=1 // pred_fallthru
      _
    %1100 = vsyncpa [#allocation3], 1
    %1101 = vsyncpa [#allocation6], 1
    %1102 = vsyncpa [#allocation4], 1
    %1103 = vsyncpa [#allocation10], 1

</llo_original>
